<compile_context>
chip_gen: v7x
topology: tpu7x:2x2x1
jax: 0.10.0
libtpu: 0.0.40
codegen_flags: <defaults>
</compile_context>

<pallas_src>
import math
import functools

import jax
import jax.numpy as jnp
from jax.experimental import pallas as pl
from jax.experimental.pallas import tpu as pltpu


def _margin_head_kernel(fea_ref, w_ref, w_inv_ref, label_ref, out_ref,
                        *, s, cos_m, sin_m, mm, threshold, tn, is_infer):
    # fea_ref:   (B, E)   full block, f32
    # w_ref:     (E, TN)  class tile of the (possibly bf16) streamed weight
    # w_inv_ref: (1, TN)  precomputed f32 inverse column norms of W
    # label_ref: (B, 1)   full block (int32)
    # out_ref:   (B, TN)  class tile of the f32 logits
    fea = fea_ref[...].astype(jnp.float32)

    # l2_norm(fea, axis=1) via rsqrt-multiply (EUP path, avoids sqrt + divide).
    ssq = jnp.sum(fea * fea, axis=1, keepdims=True)
    fea_n = fea * jax.lax.rsqrt(ssq)

    # MXU matmul in the streamed weight dtype (bf16 fast path), f32 accumulate.
    # Column normalization of W is folded in afterwards:
    #   fea_n @ (W / ||W||_col) == (fea_n @ W) * (1 / ||W||_col)
    dots = jnp.dot(fea_n.astype(w_ref.dtype), w_ref[...],
                   preferred_element_type=jnp.float32)
    cos_theta = jnp.clip(dots * w_inv_ref[...], -1.0, 1.0)

    if is_infer:
        out_ref[...] = (s * cos_theta).astype(out_ref.dtype)
        return

    sin_theta = jnp.sqrt(jnp.maximum(1.0 - cos_theta * cos_theta, 0.0))
    cos_theta_m = cos_theta * cos_m - sin_theta * sin_m
    keep_val = cos_theta - mm
    # easy-margin fallback where theta + m would wrap past pi
    cos_theta_m = jnp.where(cos_theta - threshold <= 0.0, keep_val, cos_theta_m)

    # apply the margin only at (i, label[i])
    col_base = pl.program_id(0) * tn
    col_ids = col_base + jax.lax.broadcasted_iota(jnp.int32, cos_theta.shape, 1)
    is_target = col_ids == label_ref[...]           # (B, 1) broadcast -> (B, TN)

    out = jnp.where(is_target, cos_theta_m, cos_theta)
    out_ref[...] = (s * out).astype(out_ref.dtype)


def _pick_tn(C, E, B, weight_itemsize, *, target_tn=1024,
             vmem_budget=24 * 1024 * 1024):
    """Largest class tile (multiple of 128, divisor of C) fitting the budget.

    Budget covers the double-buffered weight tile + double-buffered f32 output
    tile (the large, per-step VMEM consumers), conservatively sized so it fits
    every TPU generation (v7x has only 64 MiB physical VMEM per TC).
    Keeps C // tn >= 2 when possible so v7x's two TensorCores can each take a
    share of the "parallel" class axis.
    """
    assert C % 128 == 0, "num_class must be a multiple of 128"
    best = 128
    for t in range(128, C + 1, 128):
        if C % t != 0 or t > target_tn:
            continue
        if C // t < 2 and C > 128:
            continue
        need = 2 * E * t * weight_itemsize + 2 * B * t * 4
        if need > vmem_budget:
            continue
        best = max(best, t)
    return best


def margin_head(fea, weight, label, *, s=64.0, m=0.5, is_infer=False,
                tn=None, weight_dtype=jnp.bfloat16):
    """fea: [B, E] f32, weight: [E, C] f32, label: [B] int -> logits [B, C] f32.

    weight_dtype: dtype the weight is streamed in (bf16 default = half the HBM
    traffic of the dominant stream; pass jnp.float32 for bit-tighter logits).
    """
    B, E = fea.shape
    E2, C = weight.shape
    assert E == E2

    # Precompute the f32 inverse column norms once (single cheap XLA pass);
    # this keeps normalization exact even when the weight streams as bf16.
    w_f32 = weight.astype(jnp.float32)
    w_inv_norm = jax.lax.rsqrt(jnp.sum(w_f32 * w_f32, axis=0, keepdims=True))  # (1, C)
    w_stream = weight.astype(weight_dtype)

    w_itemsize = jnp.dtype(weight_dtype).itemsize
    if tn is None:
        tn = _pick_tn(C, E, B, w_itemsize)
    assert C % tn == 0 and tn % 128 == 0

    label2d = label.astype(jnp.int32).reshape(B, 1)

    kernel = functools.partial(
        _margin_head_kernel,
        s=float(s),
        cos_m=math.cos(m),
        sin_m=math.sin(m),
        mm=math.sin(m) * m,
        threshold=math.cos(math.pi - m),
        tn=tn,
        is_infer=bool(is_infer),
    )

    grid_spec = pltpu.PrefetchScalarGridSpec(
        num_scalar_prefetch=0,
        grid=(C // tn,),
        in_specs=[
            pl.BlockSpec((B, E), lambda j: (0, 0)),     # fea: full, reused per tile
            pl.BlockSpec((E, tn), lambda j: (0, j)),    # weight: class tile (streamed)
            pl.BlockSpec((1, tn), lambda j: (0, j)),    # 1/||W||_col: class tile
            pl.BlockSpec((B, 1), lambda j: (0, 0)),     # label: full
        ],
        out_specs=pl.BlockSpec((B, tn), lambda j: (0, j)),
    )

    # VMEM headroom: double-buffered weight + output tiles, resident fea, etc.
    vmem_need = (2 * E * tn * w_itemsize      # weight double buffer
                 + 2 * B * tn * 4             # output double buffer
                 + 2 * B * E * 4              # fea block
                 + 2 * tn * 4                 # inverse-norm tile
                 + 2 * B * 4)                 # label
    vmem_limit = int(min(max(2 * vmem_need, 32 << 20), 48 << 20))

    return pl.pallas_call(
        kernel,
        out_shape=jax.ShapeDtypeStruct((B, C), jnp.float32),
        grid_spec=grid_spec,
        compiler_params=pltpu.CompilerParams(
            dimension_semantics=("parallel",),
            vmem_limit_bytes=vmem_limit),
    )(fea, w_stream, w_inv_norm, label2d)


def _reference(fea, weight, label, *, s=64.0, m=0.5, is_infer=False):
    fea_n = fea / jnp.linalg.norm(fea, axis=1, keepdims=True)
    w_n = weight / jnp.linalg.norm(weight, axis=0, keepdims=True)
    cos = jnp.clip(fea_n @ w_n, -1.0, 1.0)
    if is_infer:
        return s * cos
    sin = jnp.sqrt(jnp.maximum(1.0 - cos * cos, 0.0))
    cos_m_ = cos * math.cos(m) - sin * math.sin(m)
    keep = cos - math.sin(m) * m
    cos_m_ = jnp.where(cos - math.cos(math.pi - m) <= 0.0, keep, cos_m_)
    onehot = jax.nn.one_hot(label, cos.shape[1], dtype=bool)
    return s * jnp.where(onehot, cos_m_, cos)


if __name__ == "__main__":
    # small, (8,128)-friendly shapes consistent with the module:
    #   batch=8, emb_size=256, num_class=512
    B, E, C = 8, 256, 512
    key = jax.random.PRNGKey(0)
    k_fea, k_w, k_lab = jax.random.split(key, 3)

    fea = jax.random.normal(k_fea, (B, E), dtype=jnp.float32)
    # deterministic parameter init (uniform(-1,1); columns are re-normalized
    # in the forward anyway, matching MarginLinear's renorm init + fwd norm)
    weight = jax.random.uniform(k_w, (E, C), dtype=jnp.float32, minval=-1.0, maxval=1.0)
    label = jax.random.randint(k_lab, (B,), 0, C, dtype=jnp.int32)

    ref_train = _reference(fea, weight, label, is_infer=False)
    ref_infer = _reference(fea, weight, label, is_infer=True)

    # f32 weight stream: bit-tight check against the f32 reference.
    tr_f32 = jax.block_until_ready(
        margin_head(fea, weight, label, is_infer=False, weight_dtype=jnp.float32))
    inf_f32 = jax.block_until_ready(
        margin_head(fea, weight, label, is_infer=True, weight_dtype=jnp.float32))
    assert jnp.allclose(tr_f32, ref_train, atol=1e-3, rtol=1e-3)
    assert jnp.allclose(inf_f32, ref_infer, atol=1e-3, rtol=1e-3)

    # bf16 weight stream (default fast path): looser tolerance on s-scaled logits.
    tr_bf16 = jax.block_until_ready(
        margin_head(fea, weight, label, is_infer=False))
    inf_bf16 = jax.block_until_ready(
        margin_head(fea, weight, label, is_infer=True))
    assert jnp.allclose(tr_bf16, ref_train, atol=0.25, rtol=2e-2)
    assert jnp.allclose(inf_bf16, ref_infer, atol=0.25, rtol=2e-2)

    print("KERNEL_OK")
</pallas_src>

<mosaic_0001>
module attributes {stable_mosaic.version = 11 : i64} {
  func.func @_margin_head_kernel(%arg0: i32, %arg1: memref<8x256xf32, #tpu.memory_space<vmem>>, %arg2: memref<256x256xf32, #tpu.memory_space<vmem>>, %arg3: memref<1x256xf32, #tpu.memory_space<vmem>>, %arg4: memref<8x1xi32, #tpu.memory_space<vmem>>, %arg5: memref<8x256xf32, #tpu.memory_space<vmem>>) attributes {dimension_semantics = [#tpu.dimension_semantics<parallel>], iteration_bounds = array<i64: 2>, scalar_prefetch = 0 : i64, scratch_operands = 0 : i64, tpu.core_type = #tpu.core_type<tc>, window_params = [{pipeline_mode = #tpu.pipeline_mode<synchronous>, transform_indices = @transform_0, window_bounds = array<i64: 8, 256>}, {transform_indices = @transform_1, window_bounds = array<i64: 256, 256>}, {transform_indices = @transform_2, window_bounds = array<i64: 1, 256>}, {pipeline_mode = #tpu.pipeline_mode<synchronous>, transform_indices = @transform_3, window_bounds = array<i64: 8, 1>}, {transform_indices = @transform_4, window_bounds = array<i64: 8, 256>}]} {
    %c0 = arith.constant 0 : index
    %c0_0 = arith.constant 0 : index
    %0 = vector.load %arg1[%c0, %c0_0] : memref<8x256xf32, #tpu.memory_space<vmem>>, vector<8x256xf32>
    %1 = arith.mulf %0, %0 : vector<8x256xf32>
    %cst = arith.constant dense<0.000000e+00> : vector<8xf32>
    %2 = vector.multi_reduction <add>, %1, %cst [1] : vector<8x256xf32> to vector<8xf32>
    %3 = vector.shape_cast %2 : vector<8xf32> to vector<8x1xf32>
    %4 = math.rsqrt %3 : vector<8x1xf32>
    %5 = vector.broadcast %4 : vector<8x1xf32> to vector<8x256xf32>
    %6 = arith.mulf %0, %5 : vector<8x256xf32>
    %c0_1 = arith.constant 0 : index
    %c0_2 = arith.constant 0 : index
    %7 = vector.load %arg2[%c0_1, %c0_2] : memref<256x256xf32, #tpu.memory_space<vmem>>, vector<256x256xf32>
    %cst_3 = arith.constant dense<0.000000e+00> : vector<8x256xf32>
    %8 = tpu.matmul %6, %7, %cst_3 {dimension_numbers = #tpu.dot_dimension_numbers<[1], [0], [0], [1], [0, 0, 1, 1], [], []>} : vector<8x256xf32>, vector<256x256xf32>, vector<8x256xf32> -> vector<8x256xf32>
    %c0_4 = arith.constant 0 : index
    %c0_5 = arith.constant 0 : index
    %9 = vector.load %arg3[%c0_4, %c0_5] : memref<1x256xf32, #tpu.memory_space<vmem>>, vector<1x256xf32>
    %10 = vector.broadcast %9 : vector<1x256xf32> to vector<8x256xf32>
    %11 = arith.mulf %8, %10 : vector<8x256xf32>
    %cst_6 = arith.constant -1.000000e+00 : f32
    %cst_7 = arith.constant 1.000000e+00 : f32
    %12 = vector.broadcast %cst_6 : f32 to vector<8x256xf32>
    %13 = arith.maximumf %12, %11 : vector<8x256xf32>
    %14 = vector.broadcast %cst_7 : f32 to vector<8x256xf32>
    %15 = arith.minimumf %14, %13 : vector<8x256xf32>
    %16 = arith.mulf %15, %15 : vector<8x256xf32>
    %cst_8 = arith.constant 1.000000e+00 : f32
    %17 = vector.broadcast %cst_8 : f32 to vector<8x256xf32>
    %18 = arith.subf %17, %16 : vector<8x256xf32>
    %cst_9 = arith.constant 0.000000e+00 : f32
    %19 = vector.broadcast %cst_9 : f32 to vector<8x256xf32>
    %20 = arith.maximumf %18, %19 : vector<8x256xf32>
    %21 = math.sqrt %20 : vector<8x256xf32>
    %cst_10 = arith.constant 0.87758255 : f32
    %22 = vector.broadcast %cst_10 : f32 to vector<8x256xf32>
    %23 = arith.mulf %15, %22 : vector<8x256xf32>
    %cst_11 = arith.constant 0.47942555 : f32
    %24 = vector.broadcast %cst_11 : f32 to vector<8x256xf32>
    %25 = arith.mulf %21, %24 : vector<8x256xf32>
    %26 = arith.subf %23, %25 : vector<8x256xf32>
    %cst_12 = arith.constant 0.239712775 : f32
    %27 = vector.broadcast %cst_12 : f32 to vector<8x256xf32>
    %28 = arith.subf %15, %27 : vector<8x256xf32>
    %cst_13 = arith.constant -0.87758255 : f32
    %29 = vector.broadcast %cst_13 : f32 to vector<8x256xf32>
    %30 = arith.subf %15, %29 : vector<8x256xf32>
    %cst_14 = arith.constant 0.000000e+00 : f32
    %31 = vector.broadcast %cst_14 : f32 to vector<8x256xf32>
    %32 = arith.cmpf ole, %30, %31 : vector<8x256xf32>
    %33 = arith.select %32, %28, %26 : vector<8x256xi1>, vector<8x256xf32>
    %c256_i32 = arith.constant 256 : i32
    %34 = arith.muli %arg0, %c256_i32 : i32
    %35 = tpu.iota {dimensions = array<i32: 1>} : vector<8x256xi32>
    %36 = vector.broadcast %34 : i32 to vector<8x256xi32>
    %37 = arith.addi %36, %35 : vector<8x256xi32>
    %c0_15 = arith.constant 0 : index
    %c0_16 = arith.constant 0 : index
    %38 = vector.load %arg4[%c0_15, %c0_16] : memref<8x1xi32, #tpu.memory_space<vmem>>, vector<8x1xi32>
    %39 = vector.broadcast %38 : vector<8x1xi32> to vector<8x256xi32>
    %40 = arith.cmpi eq, %37, %39 : vector<8x256xi32>
    %41 = arith.select %40, %33, %15 : vector<8x256xi1>, vector<8x256xf32>
    %cst_17 = arith.constant 6.400000e+01 : f32
    %42 = vector.broadcast %cst_17 : f32 to vector<8x256xf32>
    %43 = arith.mulf %42, %41 : vector<8x256xf32>
    %c0_18 = arith.constant 0 : index
    %c0_19 = arith.constant 0 : index
    %44 = vector.load %arg5[%c0_18, %c0_19] : memref<8x256xf32, #tpu.memory_space<vmem>>, vector<8x256xf32>
    tpu.vector_store %arg5[%c0_18, %c0_19], %43 {strides = array<i32>} : memref<8x256xf32, #tpu.memory_space<vmem>>, vector<8x256xf32>,
    return
  }
  func.func @transform_0(%arg0: i32) -> (i32, i32) {
    %c0_i32 = arith.constant 0 : i32
    %c0_i32_0 = arith.constant 0 : i32
    %c0_i32_1 = arith.constant 0 : i32
    return %c0_i32, %c0_i32_0 : i32, i32
  }
  func.func @transform_1(%arg0: i32) -> (i32, i32) {
    %c0_i32 = arith.constant 0 : i32
    %c0_i32_0 = arith.constant 0 : i32
    return %c0_i32, %arg0 : i32, i32
  }
  func.func @transform_2(%arg0: i32) -> (i32, i32) {
    %c0_i32 = arith.constant 0 : i32
    %c0_i32_0 = arith.constant 0 : i32
    return %c0_i32, %arg0 : i32, i32
  }
  func.func @transform_3(%arg0: i32) -> (i32, i32) {
    %c0_i32 = arith.constant 0 : i32
    %c0_i32_0 = arith.constant 0 : i32
    %c0_i32_1 = arith.constant 0 : i32
    return %c0_i32, %c0_i32_0 : i32, i32
  }
  func.func @transform_4(%arg0: i32) -> (i32, i32) {
    %c0_i32 = arith.constant 0 : i32
    %c0_i32_0 = arith.constant 0 : i32
    return %c0_i32, %arg0 : i32, i32
  }
}

</mosaic_0001>

<llo_original>
// kernel: tpu_custom_call.1
$region0: #{tpu_custom_call.1}
  #allocation0 [shape = 'u32[]', space=smem, size = 0x4, offset = 0x4, fixed_abs, tag = 'smem constant byte address 0x4 - core index']
  #allocation1 [shape = 'u32[144,128]{1,0:T(1,128)}', space=vmem, size = 0x12000, scoped, tag = 'internal scratch']
  %s0 = inlined_call_operand.hbm [shape: f32[8,256], index: 0, kind: input, shape index: {}]
  %s1 = inlined_call_operand.hbm [shape: f32[256,512], index: 1, kind: input, shape index: {}]
  %s2 = inlined_call_operand.vmem [shape: f32[1,512], index: 2, kind: input, shape index: {}]
  %s3 = inlined_call_operand.vmem [shape: s32[8,1], index: 3, kind: input, shape index: {}]
  %s4 = inlined_call_operand.hbm [shape: f32[8,512], index: 4, kind: output, shape index: {}]
  %s5 = sld [smem:[#allocation0]]
  $region57: #{tpu_custom_call.1} parent=0
    _
  %s7 = ssub.s32 1, %s5
  %s8 = scalar_select 0, %s7, %s5
  $region1: #{tpu_custom_call.1} parent=0
    #allocation2 [shape = 'u8[8192]{0}', space=vmem, size = 0x2000, scoped, tag = 'input window, operand 0, single buffered']
    #allocation3 [shape = 's32[2]{0}', space=sflag, size = 0x8, scoped, tag = 'scoped memory for tpu_custom_call.1']
    #allocation4 [shape = 's32[2]{0}', space=sflag, size = 0x8, scoped, tag = 'scoped memory for tpu_custom_call.1']
    #allocation5 [shape = 'u8[524288]{0}', space=vmem, size = 0x80000, scoped, tag = 'input window, operand 1']
    #allocation6 [shape = 's32[2]{0}', space=sflag, size = 0x8, scoped, tag = 'scoped memory for tpu_custom_call.1']
    #allocation7 [shape = 'u8[16384]{0}', space=vmem, size = 0x4000, scoped, tag = 'output window, operand 0']
    %9 = vsyncpa [#allocation3], 0
    %10 = vsyncpa [#allocation6], 0
    %s11 = scalar_lea.sflag [#allocation6], 1
    %12 = vsyncpa %s11, 0
    %13 = vsyncpa [#allocation4], 0
    %s14 = scalar_lea.sflag [#allocation4], 1
    %15 = vsyncpa %s14, 0
    loop: start=0, step=1, limit=4
    $region2: #{tpu_custom_call.1} parent=1 // loop_pre_header
      _
    $region3: #{tpu_custom_call.1} parent=1 // loop_header
      %s17 = sphi 0, %s21
      %p18 = scmp.ge.s32.totalorder %s17, 4
      %s25 = sphi 0, %s25
      %s27 = sphi 0, %s25
      %s28 = sphi 0, %s27
      %s42 = sphi 0, %s28
      %s48 = sphi 0, %s50
      %s51 = sphi 0, %s48
      %s52 = sphi 0, %s51
      %s68 = sphi 0, %s52
      %s74 = sphi 0, %s76
      %s77 = sphi 0, %s74
      %s78 = sphi 0, %s77
      %s94 = sphi 0, %s78
      %s98 = sphi 0, %s98
      %s100 = sphi 0, %s98
      %s101 = sphi 0, %s100
      %s115 = sphi 0, %s101
      %s121 = sphi 0, %s123
      %s124 = sphi 0, %s121
      %s125 = sphi 0, %s124
      %s141 = sphi 0, %s125
    $region4: #{tpu_custom_call.1} parent=1 // loop_header_branch
      %20 = sbr.rel (%p18) target = $region8
    $region5: #{tpu_custom_call.1} parent=1 // loop_body
      %s22 = ssub.s32 %s17, 1
      %s23 = ssub.s32 %s17, 2
      %s24 = sadd.s32 %s17, 1
      %s26 = sadd.s32 %s25, 1
      %p29 = scmp.eq.s32.totalorder %s17, 1
      %p30 = scmp.ne.s32.totalorder %s25, %s27
      %p31 = scmp.eq.s32.totalorder %s17, 0
      %p32 = por %p30, %p31
      %p33 = scmp.ne.s32.totalorder %s25, %s27
      %p34 = scmp.eq.s32.totalorder %s22, 1
      %p35 = por %p33, %p34
      %p36 = scmp.ne.s32.totalorder %s27, %s28
      %p37 = scmp.eq.s32.totalorder %s22, 0
      %p38 = por %p36, %p37
      %p39 = scmp.ne.s32.totalorder %s27, %s28
      %p40 = scmp.eq.s32.totalorder %s23, 1
      %p41 = por %p39, %p40
      %p43 = scmp.ne.s32.totalorder %s28, %s42
      %p44 = scmp.eq.s32.totalorder %s23, 0
      %p45 = por %p43, %p44
      %s46 = ssub.s32 %s17, %s24
      %p47 = scmp.eq.s32.totalorder %s46, 0
      %s49 = sadd.s32 %s48, 1
      %s50 = scalar_select %p47, %s48, %s49
      %p53 = pneg %p47
      %p54 = scmp.eq.s32.totalorder %s17, 1
      %p55 = por %p53, %p54
      %p56 = scmp.ne.s32.totalorder %s48, %s51
      %p57 = scmp.eq.s32.totalorder %s17, 0
      %p58 = por %p56, %p57
      %p59 = scmp.ne.s32.totalorder %s48, %s51
      %p60 = scmp.eq.s32.totalorder %s22, 1
      %p61 = por %p59, %p60
      %p62 = scmp.ne.s32.totalorder %s51, %s52
      %p63 = scmp.eq.s32.totalorder %s22, 0
      %p64 = por %p62, %p63
      %p65 = scmp.ne.s32.totalorder %s51, %s52
      %p66 = scmp.eq.s32.totalorder %s23, 1
      %p67 = por %p65, %p66
      %p69 = scmp.ne.s32.totalorder %s52, %s68
      %p70 = scmp.eq.s32.totalorder %s23, 0
      %p71 = por %p69, %p70
      %s72 = ssub.s32 %s17, %s24
      %p73 = scmp.eq.s32.totalorder %s72, 0
      %s75 = sadd.s32 %s74, 1
      %s76 = scalar_select %p73, %s74, %s75
      %p79 = pneg %p73
      %p80 = scmp.eq.s32.totalorder %s17, 1
      %p81 = por %p79, %p80
      %p82 = scmp.ne.s32.totalorder %s74, %s77
      %p83 = scmp.eq.s32.totalorder %s17, 0
      %p84 = por %p82, %p83
      %p85 = scmp.ne.s32.totalorder %s74, %s77
      %p86 = scmp.eq.s32.totalorder %s22, 1
      %p87 = por %p85, %p86
      %p88 = scmp.ne.s32.totalorder %s77, %s78
      %p89 = scmp.eq.s32.totalorder %s22, 0
      %p90 = por %p88, %p89
      %p91 = scmp.ne.s32.totalorder %s77, %s78
      %p92 = scmp.eq.s32.totalorder %s23, 1
      %p93 = por %p91, %p92
      %p95 = scmp.ne.s32.totalorder %s78, %s94
      %p96 = scmp.eq.s32.totalorder %s23, 0
      %p97 = por %p95, %p96
      %s99 = sadd.s32 %s98, 1
      %p102 = scmp.eq.s32.totalorder %s17, 1
      %p103 = scmp.ne.s32.totalorder %s98, %s100
      %p104 = scmp.eq.s32.totalorder %s17, 0
      %p105 = por %p103, %p104
      %p106 = scmp.ne.s32.totalorder %s98, %s100
      %p107 = scmp.eq.s32.totalorder %s22, 1
      %p108 = por %p106, %p107
      %p109 = scmp.ne.s32.totalorder %s100, %s101
      %p110 = scmp.eq.s32.totalorder %s22, 0
      %p111 = por %p109, %p110
      %p112 = scmp.ne.s32.totalorder %s100, %s101
      %p113 = scmp.eq.s32.totalorder %s23, 1
      %p114 = por %p112, %p113
      %p116 = scmp.ne.s32.totalorder %s101, %s115
      %p117 = scmp.eq.s32.totalorder %s23, 0
      %p118 = por %p116, %p117
      %s119 = ssub.s32 %s17, %s24
      %p120 = scmp.eq.s32.totalorder %s119, 0
      %s122 = sadd.s32 %s121, 1
      %s123 = scalar_select %p120, %s121, %s122
      %p126 = pneg %p120
      %p127 = scmp.eq.s32.totalorder %s17, 1
      %p128 = por %p126, %p127
      %p129 = scmp.ne.s32.totalorder %s121, %s124
      %p130 = scmp.eq.s32.totalorder %s17, 0
      %p131 = por %p129, %p130
      %p132 = scmp.ne.s32.totalorder %s121, %s124
      %p133 = scmp.eq.s32.totalorder %s22, 1
      %p134 = por %p132, %p133
      %p135 = scmp.ne.s32.totalorder %s124, %s125
      %p136 = scmp.eq.s32.totalorder %s22, 0
      %p137 = por %p135, %p136
      %p138 = scmp.ne.s32.totalorder %s124, %s125
      %p139 = scmp.eq.s32.totalorder %s23, 1
      %p140 = por %p138, %p139
      %p142 = scmp.ne.s32.totalorder %s125, %s141
      %p143 = scmp.eq.s32.totalorder %s23, 0
      %p144 = por %p142, %p143
      %p145 = scmp.le.s32.totalorder 1, %s17
      %p146 = scmp.lt.s32.totalorder %s17, 3
      %p147 = pnand %p145, %p146
      %p148 = pneg %p147
      // Predicated region
      $region9: #{tpu_custom_call.1} parent=5 // pred_check
        _
      $region10: #{tpu_custom_call.1} parent=5 // pred_check_branch
        %150 = sbr.rel (%p147) target = $region12
      $region11: #{tpu_custom_call.1} parent=5 // pred_region
        %s151 = ssub.s32 %s17, 1
        // Predicated region
        $region13: #{tpu_custom_call.1} parent=11 // pred_check
          %p152 = pneg %p38
        $region14: #{tpu_custom_call.1} parent=11 // pred_check_branch
          %154 = sbr.rel (%p152) target = $region16
        $region15: #{tpu_custom_call.1} parent=11 // pred_region
          %s156 = ssub.s32 256, 256
          %157 = vsyncadd [#allocation3], %s156
          %s159 = sshll.u32 [#allocation2], 4
          %s160 = int_to_ptr.vmem [resolvable:$true] %s159
          %162 = dma.hbm_to_vmem [thread:$0]  %s0, 256, %s160, [#allocation3]
        $region16: #{tpu_custom_call.1} parent=11 // pred_fallthru
          _
        // Predicated region
        $region17: #{tpu_custom_call.1} parent=11 // pred_check
          %p163 = pneg %p111
        $region18: #{tpu_custom_call.1} parent=11 // pred_check_branch
          %165 = sbr.rel (%p163) target = $region20
        $region19: #{tpu_custom_call.1} parent=11 // pred_region
          _
        $region20: #{tpu_custom_call.1} parent=11 // pred_fallthru
          _
      $region12: #{tpu_custom_call.1} parent=5 // pred_fallthru
        _
      %p166 = scmp.lt.s32.totalorder %s17, 2
      // Predicated region
      $region21: #{tpu_custom_call.1} parent=5 // pred_check
        %p167 = pneg %p166
      $region22: #{tpu_custom_call.1} parent=5 // pred_check_branch
        %169 = sbr.rel (%p167) target = $region24
      $region23: #{tpu_custom_call.1} parent=5 // pred_region
        // Predicated region
        $region25: #{tpu_custom_call.1} parent=23 // pred_check
          %p170 = pneg %p58
        $region26: #{tpu_custom_call.1} parent=23 // pred_check_branch
          %172 = sbr.rel (%p170) target = $region28
        $region27: #{tpu_custom_call.1} parent=23 // pred_region
          %s173 = sand.u32 %s48, 1
          %s174 = scalar_lea.sflag [#allocation6], %s173
          %s175 = sand.u32 %s48, 1
          %s176 = smul.addr %s175, 512
          %s177 = scalar_lea.vmem [#allocation5], %s176
          %s178 = smul.u32 2, %s17
          %s180 = ssub.s32 8192, 8192
          %181 = vsyncadd %s174, %s180
          %s182 = smul.addr %s178, 128
          %s183 = scalar_lea.hbm %s1, %s182
          %s184 = sshll.u32 %s177, 4
          %s185 = int_to_ptr.vmem [resolvable:$true] %s184
          %190 = dma.hbm_to_vmem [thread:$0]  %s183, 8192, %s185, %s174, 512, 256, 16
        $region28: #{tpu_custom_call.1} parent=23 // pred_fallthru
          _
        // Predicated region
        $region29: #{tpu_custom_call.1} parent=23 // pred_check
          %p191 = pneg %p84
        $region30: #{tpu_custom_call.1} parent=23 // pred_check_branch
          %193 = sbr.rel (%p191) target = $region32
        $region31: #{tpu_custom_call.1} parent=23 // pred_region
          %s194 = smul.u32 2, %s17
          %p195 = scmp.lt.s32.totalorder %s194, 3
          %s196 = scalar_select %p195, %s194, 3
          %s197 = scalar_lea.vmem %s2, %s196
          %s198 = smul.u32 2, %s17
        $region32: #{tpu_custom_call.1} parent=23 // pred_fallthru
          _
      $region24: #{tpu_custom_call.1} parent=5 // pred_fallthru
        _
      %p199 = scmp.le.s32.totalorder 1, %s17
      %p200 = scmp.lt.s32.totalorder %s17, 3
      %p201 = pnand %p199, %p200
      %p202 = pneg %p201
      // Predicated region
      $region33: #{tpu_custom_call.1} parent=5 // pred_check
        _
      $region34: #{tpu_custom_call.1} parent=5 // pred_check_branch
        %204 = sbr.rel (%p201) target = $region36
      $region35: #{tpu_custom_call.1} parent=5 // pred_region
        %s205 = ssub.s32 %s17, 1
        // Predicated region
        $region37: #{tpu_custom_call.1} parent=35 // pred_check
          %p206 = pneg %p38
        $region38: #{tpu_custom_call.1} parent=35 // pred_check_branch
          %208 = sbr.rel (%p206) target = $region40
        $region39: #{tpu_custom_call.1} parent=35 // pred_region
          %209 = dma.done [#allocation3], 256
        $region40: #{tpu_custom_call.1} parent=35 // pred_fallthru
          _
        %s210 = sand.u32 %s51, 1
        %s211 = scalar_lea.sflag [#allocation6], %s210
        %s212 = sand.u32 %s51, 1
        %s213 = smul.addr %s212, 512
        %s214 = scalar_lea.vmem [#allocation5], %s213
        // Predicated region
        $region41: #{tpu_custom_call.1} parent=35 // pred_check
          %p215 = pneg %p64
        $region42: #{tpu_custom_call.1} parent=35 // pred_check_branch
          %217 = sbr.rel (%p215) target = $region44
        $region43: #{tpu_custom_call.1} parent=35 // pred_region
          %218 = dma.done %s211, 8192
        $region44: #{tpu_custom_call.1} parent=35 // pred_fallthru
          _
        %p219 = pneg %p38
        %p220 = pneg %p35
        %s221 = sand.u32 %s51, 1
        %s222 = scalar_lea.sflag [#allocation6], %s221
        %s223 = sand.u32 %s51, 1
        %s224 = smul.addr %s223, 512
        %s225 = scalar_lea.vmem [#allocation5], %s224
        %p226 = pneg %p64
        %p227 = pneg %p61
        %s228 = smul.u32 2, %s22
        %p229 = scmp.lt.s32.totalorder %s228, 3
        %s230 = scalar_select %p229, %s228, 3
        %s231 = scalar_lea.vmem %s2, %s230
        %p232 = pneg %p90
        %p233 = pneg %p87
        %p234 = pneg %p111
        %p235 = pneg %p108
        %p236 = pneg %p137
        %p237 = pneg %p134
        %s238 = sand.u32 %s124, 1
        %s239 = scalar_lea.sflag [#allocation4], %s238
        %s240 = sand.u32 %s124, 1
        %s241 = smul.addr %s240, 16
        %s242 = scalar_lea.vmem [#allocation7], %s241
        %s243 = smul.u32 2, %s22
        %s244 = smul.u32 2, %s22
        %p245 = scmp.lt.s32.totalorder %s244, 3
        %s246 = scalar_select %p245, %s244, 3
        %s247 = scalar_lea.vmem %s2, %s246
        %s248 = smul.u32 2, %s22
        %s249 = smul.u32 2, %s22
        %v250 = vld [vmem:[#allocation2] sm:$0xff]
        %v251 = vld [vmem:[#allocation2 + $0x8] sm:$0xff]
        %v252 = vmul.f32 %v250, %v250
        %v253 = vmul.f32 %v251, %v251
        %v254 = vadd.f32 %v252, %v253
        %255 = vadd.xlane.f32.xlu0 %v254
        %v256 = vpop.xlane.xlu0 %255
        %v257 = vrsqrt.pop %v256
        %v258 = vmul.f32 %v250, %v257
        %v259 = vmul.f32 %v251, %v257
        %v260 = vld [vmem:[%s214] sm:$0xff]
        %v261 = vld [vmem:[%s214 + $0x8] sm:$0xff]
        %v262 = vld [vmem:[%s214 + $0x10] sm:$0xff]
        %v263 = vld [vmem:[%s214 + $0x18] sm:$0xff]
        %v264 = vld [vmem:[%s214 + $0x20] sm:$0xff]
        %v265 = vld [vmem:[%s214 + $0x28] sm:$0xff]
        %v266 = vld [vmem:[%s214 + $0x30] sm:$0xff]
        %v267 = vld [vmem:[%s214 + $0x38] sm:$0xff]
        %v268 = vld [vmem:[%s214 + $0x40] sm:$0xff]
        %v269 = vld [vmem:[%s214 + $0x48] sm:$0xff]
        %v270 = vld [vmem:[%s214 + $0x50] sm:$0xff]
        %v271 = vld [vmem:[%s214 + $0x58] sm:$0xff]
        %v272 = vld [vmem:[%s214 + $0x60] sm:$0xff]
        %v273 = vld [vmem:[%s214 + $0x68] sm:$0xff]
        %v274 = vld [vmem:[%s214 + $0x70] sm:$0xff]
        %v275 = vld [vmem:[%s214 + $0x78] sm:$0xff]
        %v276 = vld [vmem:[%s214 + $0x80] sm:$0xff]
        %v277 = vld [vmem:[%s214 + $0x88] sm:$0xff]
        %v278 = vld [vmem:[%s214 + $0x90] sm:$0xff]
        %v279 = vld [vmem:[%s214 + $0x98] sm:$0xff]
        %v280 = vld [vmem:[%s214 + $0xa0] sm:$0xff]
        %v281 = vld [vmem:[%s214 + $0xa8] sm:$0xff]
        %v282 = vld [vmem:[%s214 + $0xb0] sm:$0xff]
        %v283 = vld [vmem:[%s214 + $0xb8] sm:$0xff]
        %v284 = vld [vmem:[%s214 + $0xc0] sm:$0xff]
        %v285 = vld [vmem:[%s214 + $0xc8] sm:$0xff]
        %v286 = vld [vmem:[%s214 + $0xd0] sm:$0xff]
        %v287 = vld [vmem:[%s214 + $0xd8] sm:$0xff]
        %v288 = vld [vmem:[%s214 + $0xe0] sm:$0xff]
        %v289 = vld [vmem:[%s214 + $0xe8] sm:$0xff]
        %v290 = vld [vmem:[%s214 + $0xf0] sm:$0xff]
        %v291 = vld [vmem:[%s214 + $0xf8] sm:$0xff]
        %v292 = vld [vmem:[%s214 + $0x100] sm:$0xff]
        %v293 = vld [vmem:[%s214 + $0x108] sm:$0xff]
        %v294 = vld [vmem:[%s214 + $0x110] sm:$0xff]
        %v295 = vld [vmem:[%s214 + $0x118] sm:$0xff]
        %v296 = vld [vmem:[%s214 + $0x120] sm:$0xff]
        %v297 = vld [vmem:[%s214 + $0x128] sm:$0xff]
        %v298 = vld [vmem:[%s214 + $0x130] sm:$0xff]
        %v299 = vld [vmem:[%s214 + $0x138] sm:$0xff]
        %v300 = vld [vmem:[%s214 + $0x140] sm:$0xff]
        %v301 = vld [vmem:[%s214 + $0x148] sm:$0xff]
        %v302 = vld [vmem:[%s214 + $0x150] sm:$0xff]
        %v303 = vld [vmem:[%s214 + $0x158] sm:$0xff]
        %v304 = vld [vmem:[%s214 + $0x160] sm:$0xff]
        %v305 = vld [vmem:[%s214 + $0x168] sm:$0xff]
        %v306 = vld [vmem:[%s214 + $0x170] sm:$0xff]
        %v307 = vld [vmem:[%s214 + $0x178] sm:$0xff]
        %v308 = vld [vmem:[%s214 + $0x180] sm:$0xff]
        %v309 = vld [vmem:[%s214 + $0x188] sm:$0xff]
        %v310 = vld [vmem:[%s214 + $0x190] sm:$0xff]
        %v311 = vld [vmem:[%s214 + $0x198] sm:$0xff]
        %v312 = vld [vmem:[%s214 + $0x1a0] sm:$0xff]
        %v313 = vld [vmem:[%s214 + $0x1a8] sm:$0xff]
        %v314 = vld [vmem:[%s214 + $0x1b0] sm:$0xff]
        %v315 = vld [vmem:[%s214 + $0x1b8] sm:$0xff]
        %v316 = vld [vmem:[%s214 + $0x1c0] sm:$0xff]
        %v317 = vld [vmem:[%s214 + $0x1c8] sm:$0xff]
        %v318 = vld [vmem:[%s214 + $0x1d0] sm:$0xff]
        %v319 = vld [vmem:[%s214 + $0x1d8] sm:$0xff]
        %v320 = vld [vmem:[%s214 + $0x1e0] sm:$0xff]
        %v321 = vld [vmem:[%s214 + $0x1e8] sm:$0xff]
        %v322 = vld [vmem:[%s214 + $0x1f0] sm:$0xff]
        %v323 = vld [vmem:[%s214 + $0x1f8] sm:$0xff]
        %324 = vmatprep.subr.mxu0 %v261
        %325 = vmatpush1.msra.mxu0 %v260
        %326 = vmatprep.subr.mxu0 %v263
        %327 = vmatpush1.msra.mxu0 %v262
        %328 = vmatprep.subr.mxu0 %v265
        %329 = vmatpush1.msra.mxu0 %v264
        %330 = vmatprep.subr.mxu0 %v267
        %331 = vmatpush1.msra.mxu0 %v266
        %332 = vmatprep.subr.mxu0 %v269
        %333 = vmatpush1.msra.mxu0 %v268
        %334 = vmatprep.subr.mxu0 %v271
        %335 = vmatpush1.msra.mxu0 %v270
        %336 = vmatprep.subr.mxu0 %v273
        %337 = vmatpush1.msra.mxu0 %v272
        %338 = vmatprep.subr.mxu0 %v275
        %339 = vmatpush1.msra.mxu0 %v274
        %340 = vmatprep.subr.mxu0 %v277
        %341 = vmatpush1.msra.mxu0 %v276
        %342 = vmatprep.subr.mxu0 %v279
        %343 = vmatpush1.msra.mxu0 %v278
        %344 = vmatprep.subr.mxu0 %v281
        %345 = vmatpush1.msra.mxu0 %v280
        %346 = vmatprep.subr.mxu0 %v283
        %347 = vmatpush1.msra.mxu0 %v282
        %348 = vmatprep.subr.mxu0 %v285
        %349 = vmatpush1.msra.mxu0 %v284
        %350 = vmatprep.subr.mxu0 %v287
        %351 = vmatpush1.msra.mxu0 %v286
        %352 = vmatprep.subr.mxu0 %v289
        %353 = vmatpush1.msra.mxu0 %v288
        %354 = vmatprep.subr.mxu0 %v291
        %355 = vmatpush1.msra.mxu0 %v290
        %356 = vmatprep.subr.mxu0 %v293
        %357 = vmatpush1.msra.mxu0 %v292
        %358 = vmatprep.subr.mxu0 %v295
        %359 = vmatpush1.msra.mxu0 %v294
        %360 = vmatprep.subr.mxu0 %v297
        %361 = vmatpush1.msra.mxu0 %v296
        %362 = vmatprep.subr.mxu0 %v299
        %363 = vmatpush1.msra.mxu0 %v298
        %364 = vmatprep.subr.mxu0 %v301
        %365 = vmatpush1.msra.mxu0 %v300
        %366 = vmatprep.subr.mxu0 %v303
        %367 = vmatpush1.msra.mxu0 %v302
        %368 = vmatprep.subr.mxu0 %v305
        %369 = vmatpush1.msra.mxu0 %v304
        %370 = vmatprep.subr.mxu0 %v307
        %371 = vmatpush1.msra.mxu0 %v306
        %372 = vmatprep.subr.mxu0 %v309
        %373 = vmatpush1.msra.mxu0 %v308
        %374 = vmatprep.subr.mxu0 %v311
        %375 = vmatpush1.msra.mxu0 %v310
        %376 = vmatprep.subr.mxu0 %v313
        %377 = vmatpush1.msra.mxu0 %v312
        %378 = vmatprep.subr.mxu0 %v315
        %379 = vmatpush1.msra.mxu0 %v314
        %380 = vmatprep.subr.mxu0 %v317
        %381 = vmatpush1.msra.mxu0 %v316
        %382 = vmatprep.subr.mxu0 %v319
        %383 = vmatpush1.msra.mxu0 %v318
        %384 = vmatprep.subr.mxu0 %v321
        %385 = vmatpush1.msra.mxu0 %v320
        %386 = vmatprep.subr.mxu0 %v323
        %387 = vmatpush1.msra.mxu0 %v322
        %388 = vmatprep.mubr.f32.mxu0 %v259
        %389 = vmatmul.mubr.f32.gmra.mrb[0].mxu0 %v258
        %v390 = vpop.f32.mrb[0].mxu0
        %v391 = vadd.f32 0.0, %v390
        %v392 = vpop.f32.mrb[0].mxu0
        %v393 = vadd.f32 0.0, %v392
        %394 = vdwg.mxu0
        %v395 = vld [vmem:[%s247] sm:$0x3]
        %v397 = vlaneseq
        %v398 = vshrl.u32 %v397, 7
        %v399 = vsub.s32 0, %v398
        %v400 = vrot.slane %v395, %v399
        %v401 = vlaneseq
        %v402 = vshrl.u32 %v401, 7
        %v403 = vsub.s32 1, %v402
        %v404 = vrot.slane %v395, %v403
        %v407 = vmul.f32 %v391, %v400
        %v408 = vmul.f32 %v393, %v404
        %v409 = vmax.f32 %v407, -1.0
        %v410 = vmax.f32 %v408, -1.0
        %v411 = vmin.f32 %v409, 1.0
        %v412 = vmin.f32 %v410, 1.0
        %v413 = vmul.f32 %v411, %v411
        %v414 = vmul.f32 %v412, %v412
        %v415 = vsub.f32 1.0, %v413
        %v416 = vsub.f32 1.0, %v414
        %v417 = vmax.f32 %v415, 0.0
        %v418 = vmax.f32 %v416, 0.0
        %v419 = vrsqrt.pop %v417
        %v420 = vmul.f32 %v417, %v419
        %vm421 = vcmp.eq.f32.partialorder %v417, inf
        %v422 = vsel %vm421, %v417, %v420
        %vm423 = vcmp.eq.f32.partialorder %v417, 0.0
        %v424 = vand.u32 %v417, 2147483648
        %v425 = vsel %vm423, %v424, %v422
        %v426 = vrsqrt.pop %v418
        %v427 = vmul.f32 %v418, %v426
        %vm428 = vcmp.eq.f32.partialorder %v418, inf
        %v429 = vsel %vm428, %v418, %v427
        %vm430 = vcmp.eq.f32.partialorder %v418, 0.0
        %v431 = vand.u32 %v418, 2147483648
        %v432 = vsel %vm430, %v431, %v429
        %v433 = vmul.f32 %v411, 0.87758255
        %v434 = vmul.f32 %v412, 0.87758255
        %v435 = vmul.f32 %v425, 0.47942555
        %v436 = vmul.f32 %v432, 0.47942555
        %v437 = vsub.f32 %v433, %v435
        %v438 = vsub.f32 %v434, %v436
        %v439 = vsub.f32 %v411, 0.23971277
        %v440 = vsub.f32 %v412, 0.23971277
        %v441 = vsub.f32 %v411, -0.87758255
        %v442 = vsub.f32 %v412, -0.87758255
        %vm443 = vcmp.le.f32.partialorder %v441, 0.0
        %vm444 = vcmp.le.f32.partialorder %v442, 0.0
        %v445 = vsel %vm443, %v439, %v437
        %v446 = vsel %vm444, %v440, %v438
        %s447 = smul.u32 %s22, 256
        %v448 = vlaneseq
        %v449 = vand.u32 %v448, 127
        %v450 = vadd.s32 %v449, 128
        %v451 = vstv %s447
        %v452 = vadd.s32 %v451, %v449
        %v453 = vadd.s32 %v451, %v450
        %v454 = vld [vmem:[%s3] sm:$0xff]
        %455 = vset.pattern.permute.xlu0 0
        %456 = vperm.xlu0 %455, %v454
        %v457 = vpop.permute.xlu0 %456
        %vm458 = vcmp.eq.s32.totalorder %v452, %v457
        %vm459 = vcmp.eq.s32.totalorder %v453, %v457
        %v460 = vsel %vm458, %v445, %v411
        %v461 = vsel %vm459, %v446, %v412
        %v462 = vmul.f32 %v460, 64.0
        %v463 = vmul.f32 %v461, 64.0
        %464 = vst [vmem:[%s242] sm:$0xff] %v462
        %465 = vst [vmem:[%s242 + $0x8] sm:$0xff] %v463
        %s466 = sand.u32 %s124, 1
        %s467 = scalar_lea.sflag [#allocation4], %s466
        %s468 = sand.u32 %s124, 1
        %s469 = smul.addr %s468, 16
        %s470 = scalar_lea.vmem [#allocation7], %s469
        // Predicated region
        $region45: #{tpu_custom_call.1} parent=35 // pred_check
          %p471 = pneg %p134
        $region46: #{tpu_custom_call.1} parent=35 // pred_check_branch
          %473 = sbr.rel (%p471) target = $region48
        $region47: #{tpu_custom_call.1} parent=35 // pred_region
          %s474 = smul.u32 2, %s22
          %s476 = ssub.s32 256, 256
          %477 = vsyncadd %s467, %s476
          %s478 = smul.addr %s474, 128
          %s479 = scalar_lea.hbm %s4, %s478
          %s481 = sshll.u32 %s470, 4
          %s482 = int_to_ptr.vmem [resolvable:$true] %s481
          %484 = dma.vmem_to_hbm [thread:$0]  %s482, 256, %s479, %s467
        $region48: #{tpu_custom_call.1} parent=35 // pred_fallthru
          _
      $region36: #{tpu_custom_call.1} parent=5 // pred_fallthru
        _
      %p485 = scmp.le.s32.totalorder 2, %s17
      // Predicated region
      $region49: #{tpu_custom_call.1} parent=5 // pred_check
        %p486 = pneg %p485
      $region50: #{tpu_custom_call.1} parent=5 // pred_check_branch
        %488 = sbr.rel (%p486) target = $region52
      $region51: #{tpu_custom_call.1} parent=5 // pred_region
        %s489 = ssub.s32 %s17, 2
        // Predicated region
        $region53: #{tpu_custom_call.1} parent=51 // pred_check
          %p490 = pneg %p140
        $region54: #{tpu_custom_call.1} parent=51 // pred_check_branch
          %492 = sbr.rel (%p490) target = $region56
        $region55: #{tpu_custom_call.1} parent=51 // pred_region
          %s493 = sand.u32 %s125, 1
          %s494 = scalar_lea.sflag [#allocation4], %s493
          %s495 = sand.u32 %s125, 1
          %s496 = smul.addr %s495, 16
          %s497 = scalar_lea.vmem [#allocation7], %s496
          %498 = dma.done %s494, 256
        $region56: #{tpu_custom_call.1} parent=51 // pred_fallthru
          _
      $region52: #{tpu_custom_call.1} parent=5 // pred_fallthru
        _
    $region6: #{tpu_custom_call.1} parent=1 // loop_footer
      %s21 = sadd.s32 1, %s17
    $region7: #{tpu_custom_call.1} parent=1 // loop_footer_branch
      %16 = sbr.rel target = $region3
    $region8: #{tpu_custom_call.1} parent=1 // loop_exit
      _
    %499 = vsyncpa [#allocation3], 1
    %s500 = scalar_lea.sflag [#allocation3], 1
    %501 = vsyncpa %s500, 1
    %502 = vsyncpa [#allocation6], 1
    %s503 = scalar_lea.sflag [#allocation6], 1
    %504 = vsyncpa %s503, 1
    %505 = vsyncpa [#allocation4], 1
    %s506 = scalar_lea.sflag [#allocation4], 1
    %507 = vsyncpa %s506, 1

</llo_original>
